<compile_context>
chip_gen: v6e
topology: v6e:2x2x1
jax: 0.10.0
libtpu: 0.0.40
codegen_flags: <defaults>
</compile_context>

<pallas_src>
import functools
import math

import jax
import jax.numpy as jnp
from jax.experimental import pallas as pl
from jax.experimental.pallas import tpu as pltpu

EPS = 1e-12


def embeddings_kernel(ids_ref, table_ref, pos_ref, gamma_ref, beta_ref, out_ref, *, h_real):
    # ids_ref   : (TM, 1) int32      -- substructure ids for this row tile (clamped < V)
    # table_ref : (V_pad, H_pad) bf16 -- word embedding table (grid-resident, zero-padded)
    # pos_ref   : (TM, H_pad) f32    -- pre-tiled position embeddings (grid-resident)
    # gamma/beta: (1, H_pad) f32     -- LayerNorm affine params (zero-padded lanes)
    # out_ref   : (TM, H_pad) f32
    ids = ids_ref[...]
    tm = ids.shape[0]
    v_pad = table_ref.shape[0]
    h_pad = out_ref.shape[1]

    # Word-only one-hot selector: single compare + cast (VPU), gather on the MXU.
    # {0,1} is exact in bf16; exactly one nonzero product per row -> exact f32 selection.
    cols = jax.lax.broadcasted_iota(jnp.int32, (tm, v_pad), 1)
    onehot = (cols == ids).astype(jnp.bfloat16)
    emb = jnp.dot(onehot, table_ref[...], preferred_element_type=jnp.float32)  # (TM, H_pad) f32

    # Position embedding: plain VPU add of the resident, pre-tiled f32 slab.
    emb = emb + pos_ref[...]

    # Two-pass LayerNorm in f32 (matches the PyTorch module's subtract-mean-first form).
    # Padded lanes of `emb` are exactly zero, so the plain sum gives the real-H sum;
    # the variance masks padded lanes so they don't contribute (emb - u) terms.
    inv_h = 1.0 / h_real
    u = jnp.sum(emb, axis=-1, keepdims=True) * inv_h
    if h_real == h_pad:
        centered = emb - u
    else:
        lane = jax.lax.broadcasted_iota(jnp.int32, (tm, h_pad), 1)
        centered = jnp.where(lane < h_real, emb - u, 0.0)
    var = jnp.sum(centered * centered, axis=-1, keepdims=True) * inv_h
    x = centered * jax.lax.rsqrt(var + EPS)

    out_ref[...] = gamma_ref[...] * x + beta_ref[...]
    # TODO(synk): dropout omitted (inference identity); add pltpu.prng_* masking for training.


def embeddings_forward(input_ids, word_table, pos_table, gamma, beta, *, target_tm=512):
    B, S = input_ids.shape
    V, H = word_table.shape
    rows = B * S

    # Lane-dense hidden dim and sublane-aligned vocab dim.
    h_pad = max(128, pl.cdiv(H, 128) * 128)
    v_pad = pl.cdiv(V, 8) * 8

    # Row tile: multiple of lcm(S, 8) so every tile starts at a sequence boundary and the
    # position pattern is identical across tiles; near the 512 target; and clamped so the
    # parallel grid axis has >= 2 steps whenever rows allow (v7x megacore).
    period = math.lcm(S, 8)
    tm = max(period, (target_tm // period) * period)
    tm = min(tm, pl.cdiv(rows, period) * period)
    if rows >= 2 * period:
        tm = min(tm, max(period, (rows // (2 * period)) * period))
    rows_p = pl.cdiv(rows, tm) * tm

    # Ids: flatten, clamp (bounds-safety for the one-hot selector), pad to rows_p.
    ids = jnp.clip(input_ids.reshape(rows).astype(jnp.int32), 0, V - 1)
    if rows_p > rows:
        ids = jnp.pad(ids, (0, rows_p - rows))  # padded rows select word row 0; sliced off later
    ids2d = ids.reshape(rows_p, 1)

    # Zero-padded operands (padded lanes / rows contribute exact zeros).
    table = jnp.zeros((v_pad, h_pad), jnp.bfloat16).at[:V, :H].set(word_table.astype(jnp.bfloat16))
    pos_slab = jnp.zeros((tm, h_pad), jnp.float32).at[:, :H].set(
        jnp.tile(pos_table[:S].astype(jnp.float32), (tm // S, 1)))
    gamma2d = jnp.zeros((1, h_pad), jnp.float32).at[0, :H].set(gamma.astype(jnp.float32))
    beta2d = jnp.zeros((1, h_pad), jnp.float32).at[0, :H].set(beta.astype(jnp.float32))

    kernel = functools.partial(embeddings_kernel, h_real=H)

    out = pl.pallas_call(
        kernel,
        out_shape=jax.ShapeDtypeStruct((rows_p, h_pad), jnp.float32),
        grid_spec=pltpu.PrefetchScalarGridSpec(
            num_scalar_prefetch=0,
            grid=(rows_p // tm,),
            in_specs=[
                pl.BlockSpec((tm, 1), lambda i: (i, 0)),          # ids tile (streamed)
                pl.BlockSpec((v_pad, h_pad), lambda i: (0, 0)),    # word table (resident)
                pl.BlockSpec((tm, h_pad), lambda i: (0, 0)),       # pos slab (resident)
                pl.BlockSpec((1, h_pad), lambda i: (0, 0)),        # gamma (resident)
                pl.BlockSpec((1, h_pad), lambda i: (0, 0)),        # beta (resident)
            ],
            out_specs=pl.BlockSpec((tm, h_pad), lambda i: (i, 0)),
        ),
        compiler_params=pltpu.CompilerParams(
            dimension_semantics=("parallel",),
            vmem_limit_bytes=32 * 1024 * 1024,
        ),
    )(ids2d, table, pos_slab, gamma2d, beta2d)
    # TODO(synk): emit bf16 output (halves writeback, biggest win on v5e) if downstream accepts it.
    return out[:rows, :H].reshape(B, S, H)


def reference_forward_bf16_word_table(input_ids, word_table, pos_table, gamma, beta):
    """Same operand policy as the kernel: bf16-rounded word table, everything else f32."""
    S = input_ids.shape[1]
    wt = word_table.astype(jnp.bfloat16).astype(jnp.float32)
    pt = pos_table[:S].astype(jnp.float32)
    emb = wt[input_ids] + pt[None, :, :]
    u = emb.mean(-1, keepdims=True)
    s = ((emb - u) ** 2).mean(-1, keepdims=True)
    x = (emb - u) / jnp.sqrt(s + EPS)
    return gamma * x + beta


def reference_forward_f32(input_ids, word_table, pos_table, gamma, beta):
    """Original-module semantics in full f32 (sanity check only)."""
    S = input_ids.shape[1]
    emb = word_table[input_ids] + pos_table[:S][None, :, :]
    u = emb.mean(-1, keepdims=True)
    s = ((emb - u) ** 2).mean(-1, keepdims=True)
    x = (emb - u) / jnp.sqrt(s + EPS)
    return gamma * x + beta


if __name__ == "__main__":
    # Small shapes consistent with the module: batch=2, seq=8, hidden=32,
    # substructure vocab=16, max_drug_len=8.
    B, S, H = 2, 8, 32
    substructure_size = 16
    max_drug_len = 8

    key = jax.random.PRNGKey(0)
    k_ids, k_word, k_pos = jax.random.split(key, 3)

    input_ids = jax.random.randint(k_ids, (B, S), 0, substructure_size, dtype=jnp.int32)
    word_table = jax.random.normal(k_word, (substructure_size, H), dtype=jnp.float32)
    pos_table = jax.random.normal(k_pos, (max_drug_len, H), dtype=jnp.float32)
    gamma = jnp.ones((H,), dtype=jnp.float32)
    beta = jnp.zeros((H,), dtype=jnp.float32)

    out = embeddings_forward(input_ids, word_table, pos_table, gamma, beta)
    out = jax.block_until_ready(out)
    assert out.shape == (B, S, H)

    # Tight check against the bf16-word-table reference (same operand policy as the kernel).
    ref = reference_forward_bf16_word_table(input_ids, word_table, pos_table, gamma, beta)
    assert jnp.allclose(out, ref, atol=1e-4, rtol=1e-4), "mismatch vs bf16-word-table reference"

    # Loose check against the pure-f32 module semantics (bf16 word-table rounding only).
    ref32 = reference_forward_f32(input_ids, word_table, pos_table, gamma, beta)
    assert jnp.allclose(out, ref32, atol=1e-1, rtol=1e-1), "mismatch vs f32 module reference"

    print("KERNEL_OK")
</pallas_src>

<mosaic_0001>
module attributes {stable_mosaic.version = 11 : i64} {
  func.func @embeddings_kernel(%arg0: i32, %arg1: memref<8x1xi32, #tpu.memory_space<vmem>>, %arg2: memref<16x128xbf16, #tpu.memory_space<vmem>>, %arg3: memref<8x128xf32, #tpu.memory_space<vmem>>, %arg4: memref<1x128xf32, #tpu.memory_space<vmem>>, %arg5: memref<1x128xf32, #tpu.memory_space<vmem>>, %arg6: memref<8x128xf32, #tpu.memory_space<vmem>>) attributes {dimension_semantics = [#tpu.dimension_semantics<parallel>], iteration_bounds = array<i64: 2>, scalar_prefetch = 0 : i64, scratch_operands = 0 : i64, tpu.core_type = #tpu.core_type<tc>, window_params = [{transform_indices = @transform_0, window_bounds = array<i64: 8, 1>}, {pipeline_mode = #tpu.pipeline_mode<synchronous>, transform_indices = @transform_1, window_bounds = array<i64: 16, 128>}, {pipeline_mode = #tpu.pipeline_mode<synchronous>, transform_indices = @transform_2, window_bounds = array<i64: 8, 128>}, {pipeline_mode = #tpu.pipeline_mode<synchronous>, transform_indices = @transform_3, window_bounds = array<i64: 1, 128>}, {pipeline_mode = #tpu.pipeline_mode<synchronous>, transform_indices = @transform_4, window_bounds = array<i64: 1, 128>}, {transform_indices = @transform_5, window_bounds = array<i64: 8, 128>}]} {
    %c0 = arith.constant 0 : index
    %c0_0 = arith.constant 0 : index
    %0 = vector.load %arg1[%c0, %c0_0] : memref<8x1xi32, #tpu.memory_space<vmem>>, vector<8x1xi32>
    %1 = tpu.iota {dimensions = array<i32: 1>} : vector<8x16xi32>
    %2 = vector.broadcast %0 : vector<8x1xi32> to vector<8x16xi32>
    %3 = arith.cmpi eq, %1, %2 : vector<8x16xi32>
    %4 = arith.extui %3 : vector<8x16xi1> to vector<8x16xi32>
    %5 = arith.sitofp %4 : vector<8x16xi32> to vector<8x16xf32>
    %6 = arith.truncf %5 : vector<8x16xf32> to vector<8x16xbf16>
    %c0_1 = arith.constant 0 : index
    %c0_2 = arith.constant 0 : index
    %7 = vector.load %arg2[%c0_1, %c0_2] : memref<16x128xbf16, #tpu.memory_space<vmem>>, vector<16x128xbf16>
    %cst = arith.constant dense<0.000000e+00> : vector<8x128xf32>
    %8 = tpu.matmul %6, %7, %cst {dimension_numbers = #tpu.dot_dimension_numbers<[1], [0], [0], [1], [0, 0, 1, 1], [], []>} : vector<8x16xbf16>, vector<16x128xbf16>, vector<8x128xf32> -> vector<8x128xf32>
    %c0_3 = arith.constant 0 : index
    %c0_4 = arith.constant 0 : index
    %9 = vector.load %arg3[%c0_3, %c0_4] : memref<8x128xf32, #tpu.memory_space<vmem>>, vector<8x128xf32>
    %10 = arith.addf %8, %9 : vector<8x128xf32>
    %cst_5 = arith.constant dense<0.000000e+00> : vector<8xf32>
    %11 = vector.multi_reduction <add>, %10, %cst_5 [1] : vector<8x128xf32> to vector<8xf32>
    %12 = vector.shape_cast %11 : vector<8xf32> to vector<8x1xf32>
    %cst_6 = arith.constant 3.125000e-02 : f32
    %13 = vector.broadcast %cst_6 : f32 to vector<8x1xf32>
    %14 = arith.mulf %12, %13 : vector<8x1xf32>
    %15 = tpu.iota {dimensions = array<i32: 1>} : vector<8x128xi32>
    %c32_i32 = arith.constant 32 : i32
    %16 = vector.broadcast %c32_i32 : i32 to vector<8x128xi32>
    %17 = arith.cmpi slt, %15, %16 : vector<8x128xi32>
    %18 = vector.broadcast %14 : vector<8x1xf32> to vector<8x128xf32>
    %19 = arith.subf %10, %18 : vector<8x128xf32>
    %cst_7 = arith.constant 0.000000e+00 : f32
    %20 = vector.broadcast %cst_7 : f32 to vector<8x128xf32>
    %21 = arith.select %17, %19, %20 : vector<8x128xi1>, vector<8x128xf32>
    %22 = arith.mulf %21, %21 : vector<8x128xf32>
    %cst_8 = arith.constant dense<0.000000e+00> : vector<8xf32>
    %23 = vector.multi_reduction <add>, %22, %cst_8 [1] : vector<8x128xf32> to vector<8xf32>
    %24 = vector.shape_cast %23 : vector<8xf32> to vector<8x1xf32>
    %cst_9 = arith.constant 3.125000e-02 : f32
    %25 = vector.broadcast %cst_9 : f32 to vector<8x1xf32>
    %26 = arith.mulf %24, %25 : vector<8x1xf32>
    %cst_10 = arith.constant 9.99999996E-13 : f32
    %27 = vector.broadcast %cst_10 : f32 to vector<8x1xf32>
    %28 = arith.addf %26, %27 : vector<8x1xf32>
    %29 = math.rsqrt %28 : vector<8x1xf32>
    %30 = vector.broadcast %29 : vector<8x1xf32> to vector<8x128xf32>
    %31 = arith.mulf %21, %30 : vector<8x128xf32>
    %c0_11 = arith.constant 0 : index
    %c0_12 = arith.constant 0 : index
    %32 = vector.load %arg4[%c0_11, %c0_12] : memref<1x128xf32, #tpu.memory_space<vmem>>, vector<1x128xf32>
    %33 = vector.broadcast %32 : vector<1x128xf32> to vector<8x128xf32>
    %34 = arith.mulf %33, %31 : vector<8x128xf32>
    %c0_13 = arith.constant 0 : index
    %c0_14 = arith.constant 0 : index
    %35 = vector.load %arg5[%c0_13, %c0_14] : memref<1x128xf32, #tpu.memory_space<vmem>>, vector<1x128xf32>
    %36 = vector.broadcast %35 : vector<1x128xf32> to vector<8x128xf32>
    %37 = arith.addf %34, %36 : vector<8x128xf32>
    %c0_15 = arith.constant 0 : index
    %c0_16 = arith.constant 0 : index
    %38 = vector.load %arg6[%c0_15, %c0_16] : memref<8x128xf32, #tpu.memory_space<vmem>>, vector<8x128xf32>
    tpu.vector_store %arg6[%c0_15, %c0_16], %37 {strides = array<i32>} : memref<8x128xf32, #tpu.memory_space<vmem>>, vector<8x128xf32>,
    return
  }
  func.func @transform_0(%arg0: i32) -> (i32, i32) {
    %c0_i32 = arith.constant 0 : i32
    %c0_i32_0 = arith.constant 0 : i32
    return %arg0, %c0_i32 : i32, i32
  }
  func.func @transform_1(%arg0: i32) -> (i32, i32) {
    %c0_i32 = arith.constant 0 : i32
    %c0_i32_0 = arith.constant 0 : i32
    %c0_i32_1 = arith.constant 0 : i32
    return %c0_i32, %c0_i32_0 : i32, i32
  }
  func.func @transform_2(%arg0: i32) -> (i32, i32) {
    %c0_i32 = arith.constant 0 : i32
    %c0_i32_0 = arith.constant 0 : i32
    %c0_i32_1 = arith.constant 0 : i32
    return %c0_i32, %c0_i32_0 : i32, i32
  }
  func.func @transform_3(%arg0: i32) -> (i32, i32) {
    %c0_i32 = arith.constant 0 : i32
    %c0_i32_0 = arith.constant 0 : i32
    %c0_i32_1 = arith.constant 0 : i32
    return %c0_i32, %c0_i32_0 : i32, i32
  }
  func.func @transform_4(%arg0: i32) -> (i32, i32) {
    %c0_i32 = arith.constant 0 : i32
    %c0_i32_0 = arith.constant 0 : i32
    %c0_i32_1 = arith.constant 0 : i32
    return %c0_i32, %c0_i32_0 : i32, i32
  }
  func.func @transform_5(%arg0: i32) -> (i32, i32) {
    %c0_i32 = arith.constant 0 : i32
    %c0_i32_0 = arith.constant 0 : i32
    return %arg0, %c0_i32 : i32, i32
  }
}

</mosaic_0001>

<llo_original>
// kernel: tpu_custom_call.1
$region0: #{tpu_custom_call.1}
  #allocation0 [shape = 'u32[]', space=smem, size = 0x4, offset = 0x4, fixed_abs, tag = 'smem constant byte address 0x4 - core index']
  #allocation1 [shape = 'u32[144,128]{1,0:T(1,128)}', space=vmem, size = 0x12000, scoped, tag = 'internal scratch']
  %s0 = inlined_call_operand.vmem [shape: s32[16,1], index: 0, kind: input, shape index: {}]
  %s1 = inlined_call_operand.vmem [shape: bf16[16,128], index: 1, kind: input, shape index: {}]
  %s2 = inlined_call_operand.vmem [shape: f32[8,128], index: 2, kind: input, shape index: {}]
  %s3 = inlined_call_operand.vmem [shape: f32[1,128], index: 3, kind: input, shape index: {}]
  %s4 = inlined_call_operand.vmem [shape: f32[1,128], index: 4, kind: input, shape index: {}]
  %s5 = inlined_call_operand.hbm [shape: f32[16,128], index: 5, kind: output, shape index: {}]
  %s6 = sld [smem:[#allocation0]]
  $region53: #{tpu_custom_call.1} parent=0
    _
  %s8 = ssub.s32 1, %s6
  %s9 = scalar_select 0, %s8, %s6
  $region1: #{tpu_custom_call.1} parent=0
    #allocation2 [shape = 'u8[8192]{0}', space=vmem, size = 0x2000, scoped, tag = 'output window, operand 0']
    #allocation3 [shape = 's32[2]{0}', space=sflag, size = 0x8, scoped, tag = 'scoped memory for tpu_custom_call.1']
    %10 = vsyncpa [#allocation3], 0
    %s11 = scalar_lea.sflag [#allocation3], 1
    %12 = vsyncpa %s11, 0
    loop: start=0, step=1, limit=4
    $region2: #{tpu_custom_call.1} parent=1 // loop_pre_header
      _
    $region3: #{tpu_custom_call.1} parent=1 // loop_header
      %s14 = sphi 0, %s18
      %p15 = scmp.ge.s32.totalorder %s14, 4
      %s24 = sphi 0, %s26
      %s27 = sphi 0, %s24
      %s28 = sphi 0, %s27
      %s44 = sphi 0, %s28
      %s48 = sphi 0, %s48
      %s50 = sphi 0, %s48
      %s51 = sphi 0, %s50
      %s65 = sphi 0, %s51
      %s69 = sphi 0, %s69
      %s71 = sphi 0, %s69
      %s72 = sphi 0, %s71
      %s86 = sphi 0, %s72
      %s90 = sphi 0, %s90
      %s92 = sphi 0, %s90
      %s93 = sphi 0, %s92
      %s107 = sphi 0, %s93
      %s111 = sphi 0, %s111
      %s113 = sphi 0, %s111
      %s114 = sphi 0, %s113
      %s128 = sphi 0, %s114
      %s134 = sphi 0, %s136
      %s137 = sphi 0, %s134
      %s138 = sphi 0, %s137
      %s154 = sphi 0, %s138
    $region4: #{tpu_custom_call.1} parent=1 // loop_header_branch
      %17 = sbr.rel (%p15) target = $region8
    $region5: #{tpu_custom_call.1} parent=1 // loop_body
      %s19 = ssub.s32 %s14, 1
      %s20 = ssub.s32 %s14, 2
      %s21 = sadd.s32 %s14, 1
      %s22 = ssub.s32 %s14, %s21
      %p23 = scmp.eq.s32.totalorder %s22, 0
      %s25 = sadd.s32 %s24, 1
      %s26 = scalar_select %p23, %s24, %s25
      %p29 = pneg %p23
      %p30 = scmp.eq.s32.totalorder %s14, 1
      %p31 = por %p29, %p30
      %p32 = scmp.ne.s32.totalorder %s24, %s27
      %p33 = scmp.eq.s32.totalorder %s14, 0
      %p34 = por %p32, %p33
      %p35 = scmp.ne.s32.totalorder %s24, %s27
      %p36 = scmp.eq.s32.totalorder %s19, 1
      %p37 = por %p35, %p36
      %p38 = scmp.ne.s32.totalorder %s27, %s28
      %p39 = scmp.eq.s32.totalorder %s19, 0
      %p40 = por %p38, %p39
      %p41 = scmp.ne.s32.totalorder %s27, %s28
      %p42 = scmp.eq.s32.totalorder %s20, 1
      %p43 = por %p41, %p42
      %p45 = scmp.ne.s32.totalorder %s28, %s44
      %p46 = scmp.eq.s32.totalorder %s20, 0
      %p47 = por %p45, %p46
      %s49 = sadd.s32 %s48, 1
      %p52 = scmp.eq.s32.totalorder %s14, 1
      %p53 = scmp.ne.s32.totalorder %s48, %s50
      %p54 = scmp.eq.s32.totalorder %s14, 0
      %p55 = por %p53, %p54
      %p56 = scmp.ne.s32.totalorder %s48, %s50
      %p57 = scmp.eq.s32.totalorder %s19, 1
      %p58 = por %p56, %p57
      %p59 = scmp.ne.s32.totalorder %s50, %s51
      %p60 = scmp.eq.s32.totalorder %s19, 0
      %p61 = por %p59, %p60
      %p62 = scmp.ne.s32.totalorder %s50, %s51
      %p63 = scmp.eq.s32.totalorder %s20, 1
      %p64 = por %p62, %p63
      %p66 = scmp.ne.s32.totalorder %s51, %s65
      %p67 = scmp.eq.s32.totalorder %s20, 0
      %p68 = por %p66, %p67
      %s70 = sadd.s32 %s69, 1
      %p73 = scmp.eq.s32.totalorder %s14, 1
      %p74 = scmp.ne.s32.totalorder %s69, %s71
      %p75 = scmp.eq.s32.totalorder %s14, 0
      %p76 = por %p74, %p75
      %p77 = scmp.ne.s32.totalorder %s69, %s71
      %p78 = scmp.eq.s32.totalorder %s19, 1
      %p79 = por %p77, %p78
      %p80 = scmp.ne.s32.totalorder %s71, %s72
      %p81 = scmp.eq.s32.totalorder %s19, 0
      %p82 = por %p80, %p81
      %p83 = scmp.ne.s32.totalorder %s71, %s72
      %p84 = scmp.eq.s32.totalorder %s20, 1
      %p85 = por %p83, %p84
      %p87 = scmp.ne.s32.totalorder %s72, %s86
      %p88 = scmp.eq.s32.totalorder %s20, 0
      %p89 = por %p87, %p88
      %s91 = sadd.s32 %s90, 1
      %p94 = scmp.eq.s32.totalorder %s14, 1
      %p95 = scmp.ne.s32.totalorder %s90, %s92
      %p96 = scmp.eq.s32.totalorder %s14, 0
      %p97 = por %p95, %p96
      %p98 = scmp.ne.s32.totalorder %s90, %s92
      %p99 = scmp.eq.s32.totalorder %s19, 1
      %p100 = por %p98, %p99
      %p101 = scmp.ne.s32.totalorder %s92, %s93
      %p102 = scmp.eq.s32.totalorder %s19, 0
      %p103 = por %p101, %p102
      %p104 = scmp.ne.s32.totalorder %s92, %s93
      %p105 = scmp.eq.s32.totalorder %s20, 1
      %p106 = por %p104, %p105
      %p108 = scmp.ne.s32.totalorder %s93, %s107
      %p109 = scmp.eq.s32.totalorder %s20, 0
      %p110 = por %p108, %p109
      %s112 = sadd.s32 %s111, 1
      %p115 = scmp.eq.s32.totalorder %s14, 1
      %p116 = scmp.ne.s32.totalorder %s111, %s113
      %p117 = scmp.eq.s32.totalorder %s14, 0
      %p118 = por %p116, %p117
      %p119 = scmp.ne.s32.totalorder %s111, %s113
      %p120 = scmp.eq.s32.totalorder %s19, 1
      %p121 = por %p119, %p120
      %p122 = scmp.ne.s32.totalorder %s113, %s114
      %p123 = scmp.eq.s32.totalorder %s19, 0
      %p124 = por %p122, %p123
      %p125 = scmp.ne.s32.totalorder %s113, %s114
      %p126 = scmp.eq.s32.totalorder %s20, 1
      %p127 = por %p125, %p126
      %p129 = scmp.ne.s32.totalorder %s114, %s128
      %p130 = scmp.eq.s32.totalorder %s20, 0
      %p131 = por %p129, %p130
      %s132 = ssub.s32 %s14, %s21
      %p133 = scmp.eq.s32.totalorder %s132, 0
      %s135 = sadd.s32 %s134, 1
      %s136 = scalar_select %p133, %s134, %s135
      %p139 = pneg %p133
      %p140 = scmp.eq.s32.totalorder %s14, 1
      %p141 = por %p139, %p140
      %p142 = scmp.ne.s32.totalorder %s134, %s137
      %p143 = scmp.eq.s32.totalorder %s14, 0
      %p144 = por %p142, %p143
      %p145 = scmp.ne.s32.totalorder %s134, %s137
      %p146 = scmp.eq.s32.totalorder %s19, 1
      %p147 = por %p145, %p146
      %p148 = scmp.ne.s32.totalorder %s137, %s138
      %p149 = scmp.eq.s32.totalorder %s19, 0
      %p150 = por %p148, %p149
      %p151 = scmp.ne.s32.totalorder %s137, %s138
      %p152 = scmp.eq.s32.totalorder %s20, 1
      %p153 = por %p151, %p152
      %p155 = scmp.ne.s32.totalorder %s138, %s154
      %p156 = scmp.eq.s32.totalorder %s20, 0
      %p157 = por %p155, %p156
      %p158 = scmp.le.s32.totalorder 1, %s14
      %p159 = scmp.lt.s32.totalorder %s14, 3
      %p160 = pnand %p158, %p159
      %p161 = pneg %p160
      // Predicated region
      $region9: #{tpu_custom_call.1} parent=5 // pred_check
        _
      $region10: #{tpu_custom_call.1} parent=5 // pred_check_branch
        %163 = sbr.rel (%p160) target = $region12
      $region11: #{tpu_custom_call.1} parent=5 // pred_region
        %s164 = ssub.s32 %s14, 1
        // Predicated region
        $region13: #{tpu_custom_call.1} parent=11 // pred_check
          %p165 = pneg %p61
        $region14: #{tpu_custom_call.1} parent=11 // pred_check_branch
          %167 = sbr.rel (%p165) target = $region16
        $region15: #{tpu_custom_call.1} parent=11 // pred_region
          _
        $region16: #{tpu_custom_call.1} parent=11 // pred_fallthru
          _
        // Predicated region
        $region17: #{tpu_custom_call.1} parent=11 // pred_check
          %p168 = pneg %p82
        $region18: #{tpu_custom_call.1} parent=11 // pred_check_branch
          %170 = sbr.rel (%p168) target = $region20
        $region19: #{tpu_custom_call.1} parent=11 // pred_region
          _
        $region20: #{tpu_custom_call.1} parent=11 // pred_fallthru
          _
        // Predicated region
        $region21: #{tpu_custom_call.1} parent=11 // pred_check
          %p171 = pneg %p103
        $region22: #{tpu_custom_call.1} parent=11 // pred_check_branch
          %173 = sbr.rel (%p171) target = $region24
        $region23: #{tpu_custom_call.1} parent=11 // pred_region
          _
        $region24: #{tpu_custom_call.1} parent=11 // pred_fallthru
          _
        // Predicated region
        $region25: #{tpu_custom_call.1} parent=11 // pred_check
          %p174 = pneg %p124
        $region26: #{tpu_custom_call.1} parent=11 // pred_check_branch
          %176 = sbr.rel (%p174) target = $region28
        $region27: #{tpu_custom_call.1} parent=11 // pred_region
          _
        $region28: #{tpu_custom_call.1} parent=11 // pred_fallthru
          _
      $region12: #{tpu_custom_call.1} parent=5 // pred_fallthru
        _
      %p177 = scmp.lt.s32.totalorder %s14, 2
      // Predicated region
      $region29: #{tpu_custom_call.1} parent=5 // pred_check
        %p178 = pneg %p177
      $region30: #{tpu_custom_call.1} parent=5 // pred_check_branch
        %180 = sbr.rel (%p178) target = $region32
      $region31: #{tpu_custom_call.1} parent=5 // pred_region
        // Predicated region
        $region33: #{tpu_custom_call.1} parent=31 // pred_check
          %p181 = pneg %p34
        $region34: #{tpu_custom_call.1} parent=31 // pred_check_branch
          %183 = sbr.rel (%p181) target = $region36
        $region35: #{tpu_custom_call.1} parent=31 // pred_region
          %p184 = scmp.lt.s32.totalorder %s14, 1
          %s185 = scalar_select %p184, %s14, 1
          %s186 = smul.addr %s185, 8
          %s187 = scalar_lea.vmem %s0, %s186
        $region36: #{tpu_custom_call.1} parent=31 // pred_fallthru
          _
      $region32: #{tpu_custom_call.1} parent=5 // pred_fallthru
        _
      %p188 = scmp.le.s32.totalorder 1, %s14
      %p189 = scmp.lt.s32.totalorder %s14, 3
      %p190 = pnand %p188, %p189
      %p191 = pneg %p190
      // Predicated region
      $region37: #{tpu_custom_call.1} parent=5 // pred_check
        _
      $region38: #{tpu_custom_call.1} parent=5 // pred_check_branch
        %193 = sbr.rel (%p190) target = $region40
      $region39: #{tpu_custom_call.1} parent=5 // pred_region
        %s194 = ssub.s32 %s14, 1
        %p195 = scmp.lt.s32.totalorder %s19, 1
        %s196 = scalar_select %p195, %s19, 1
        %s197 = smul.addr %s196, 8
        %s198 = scalar_lea.vmem %s0, %s197
        %p199 = pneg %p40
        %p200 = pneg %p37
        %p201 = pneg %p61
        %p202 = pneg %p58
        %p203 = pneg %p82
        %p204 = pneg %p79
        %p205 = pneg %p103
        %p206 = pneg %p100
        %p207 = pneg %p124
        %p208 = pneg %p121
        %p209 = pneg %p150
        %p210 = pneg %p147
        %s211 = sand.u32 %s137, 1
        %s212 = scalar_lea.sflag [#allocation3], %s211
        %s213 = sand.u32 %s137, 1
        %s214 = smul.addr %s213, 8
        %s215 = scalar_lea.vmem [#allocation2], %s214
        %p216 = scmp.lt.s32.totalorder %s19, 1
        %s217 = scalar_select %p216, %s19, 1
        %s218 = smul.addr %s217, 8
        %s219 = scalar_lea.vmem %s0, %s218
        %v221 = vld [vmem:[%s219] sm:$0xff]
        %v222 = vlaneseq
        %v223 = vand.u32 %v222, 127
        %224 = vset.pattern.permute.xlu0 0
        %225 = vperm.xlu0 %224, %v221
        %v226 = vpop.permute.xlu0 %225
        %vm227 = vcmp.eq.s32.totalorder %v223, %v226
        %v228 = vsel %vm227, 1, 0
        %v229 = vcvt.s32.f32 %v228
        %v230 = vpack.c.bf16 %v229, %v229
        %v231 = vld [vmem:[%s1] sm:$0xf]
        %v232 = vld [vmem:[%s1 + $0x4] sm:$0xf]
        %v233 = vld [vmem:[%s2] sm:$0xff]
        %v236 = vunpack.c.l.b16 %v231
        %v237 = vunpack.c.l.b16 %v232
        %v238 = vpack.c.b16 %v237, %v236
        %vm240 = vcmask 130048
        %v242 = vsel %vm240, %v230, 0
        %244 = vmatprep.subr.bf16.mxu0 0
        %245 = vmatpush1.bf16.msra.mxu0 0
        %246 = vmatprep.subr.bf16.mxu0 0
        %247 = vmatpush1.bf16.msra.mxu0 0
        %248 = vmatprep.subr.bf16.mxu0 0
        %249 = vmatpush1.bf16.msra.mxu0 0
        %250 = vmatprep.subr.bf16.mxu0 0
        %251 = vmatpush1.bf16.msra.mxu0 0
        %252 = vmatprep.subr.bf16.mxu0 0
        %253 = vmatpush1.bf16.msra.mxu0 0
        %254 = vmatprep.subr.bf16.mxu0 0
        %255 = vmatpush1.bf16.msra.mxu0 0
        %256 = vmatprep.subr.bf16.mxu0 0
        %257 = vmatpush1.bf16.msra.mxu0 0
        %258 = vmatprep.subr.bf16.mxu0 0
        %259 = vmatpush1.bf16.msra.mxu0 %v238
        %260 = vmatprep.subr.bf16.mxu0 0
        %261 = vmatpush2.bf16.msra.mxu0 0
        %262 = vmatprep.subr.bf16.mxu0 0
        %263 = vmatpush2.bf16.msra.mxu0 0
        %264 = vmatprep.subr.bf16.mxu0 0
        %265 = vmatpush2.bf16.msra.mxu0 0
        %266 = vmatprep.subr.bf16.mxu0 0
        %267 = vmatpush2.bf16.msra.mxu0 0
        %268 = vmatprep.subr.bf16.mxu0 0
        %269 = vmatpush2.bf16.msra.mxu0 0
        %270 = vmatprep.subr.bf16.mxu0 0
        %271 = vmatpush2.bf16.msra.mxu0 0
        %272 = vmatprep.subr.bf16.mxu0 0
        %273 = vmatpush2.bf16.msra.mxu0 0
        %274 = vmatprep.subr.bf16.mxu0 0
        %275 = vmatpush2.bf16.msra.mxu0 0
        %276 = vmatprep.mubr.bf16.mxu0 0
        %277 = vmatmul.mubr.bf16.gmra.mxu0 %v242
        %v278 = vpop.f32.mrf.mxu0
        %v279 = vadd.f32 %v233, %v278
        %v280 = vpop.f32.mrf.mxu0
        %v281 = vpop.f32.mrf.mxu0
        %v282 = vpop.f32.mrf.mxu0
        %283 = vdwg.mxu0
        %284 = vadd.xlane.f32.xlu0 %v279
        %v285 = vpop.xlane.xlu0 %284
        %v286 = vmul.f32 %v285, 0.03125
        %vm287 = vcmp.lt.s32.totalorder %v223, 32
        %v288 = vsub.f32 %v279, %v286
        %v289 = vsel %vm287, %v288, 0.0
        %v290 = vmul.f32 %v289, %v289
        %291 = vadd.xlane.f32.xlu0 %v290
        %v292 = vpop.xlane.xlu0 %291
        %v293 = vmul.f32 %v292, 0.03125
        %v294 = vadd.f32 %v293, 1e-12
        %v295 = vrsqrt.pop %v294
        %v296 = vmul.f32 %v289, %v295
        %v297 = vld [vmem:[%s3] sm:$0x1]
        %v299 = vlaneseq
        %v300 = vshrl.u32 %v299, 7
        %v301 = vsub.s32 0, %v300
        %v302 = vrot.slane %v297, %v301
        %v304 = vmul.f32 %v302, %v296
        %v305 = vld [vmem:[%s4] sm:$0x1]
        %v307 = vlaneseq
        %v308 = vshrl.u32 %v307, 7
        %v309 = vsub.s32 0, %v308
        %v310 = vrot.slane %v305, %v309
        %v312 = vadd.f32 %v304, %v310
        %313 = vst [vmem:[%s215] sm:$0xff] %v312
        %s314 = sand.u32 %s137, 1
        %s315 = scalar_lea.sflag [#allocation3], %s314
        %s316 = sand.u32 %s137, 1
        %s317 = smul.addr %s316, 8
        %s318 = scalar_lea.vmem [#allocation2], %s317
        // Predicated region
        $region41: #{tpu_custom_call.1} parent=39 // pred_check
          %p319 = pneg %p147
        $region42: #{tpu_custom_call.1} parent=39 // pred_check_branch
          %321 = sbr.rel (%p319) target = $region44
        $region43: #{tpu_custom_call.1} parent=39 // pred_region
          %s323 = ssub.s32 128, 128
          %324 = vsyncadd %s315, %s323
          %s325 = smul.addr %s19, 128
          %s326 = scalar_lea.hbm %s5, %s325
          %s328 = sshll.u32 %s318, 4
          %s329 = int_to_ptr.vmem [resolvable:$true] %s328
          %331 = dma.vmem_to_hbm [thread:$0]  %s329, 128, %s326, %s315
        $region44: #{tpu_custom_call.1} parent=39 // pred_fallthru
          _
      $region40: #{tpu_custom_call.1} parent=5 // pred_fallthru
        _
      %p332 = scmp.le.s32.totalorder 2, %s14
      // Predicated region
      $region45: #{tpu_custom_call.1} parent=5 // pred_check
        %p333 = pneg %p332
      $region46: #{tpu_custom_call.1} parent=5 // pred_check_branch
        %335 = sbr.rel (%p333) target = $region48
      $region47: #{tpu_custom_call.1} parent=5 // pred_region
        %s336 = ssub.s32 %s14, 2
        // Predicated region
        $region49: #{tpu_custom_call.1} parent=47 // pred_check
          %p337 = pneg %p153
        $region50: #{tpu_custom_call.1} parent=47 // pred_check_branch
          %339 = sbr.rel (%p337) target = $region52
        $region51: #{tpu_custom_call.1} parent=47 // pred_region
          %s340 = sand.u32 %s138, 1
          %s341 = scalar_lea.sflag [#allocation3], %s340
          %s342 = sand.u32 %s138, 1
          %s343 = smul.addr %s342, 8
          %s344 = scalar_lea.vmem [#allocation2], %s343
          %345 = dma.done %s341, 128
        $region52: #{tpu_custom_call.1} parent=47 // pred_fallthru
          _
      $region48: #{tpu_custom_call.1} parent=5 // pred_fallthru
        _
    $region6: #{tpu_custom_call.1} parent=1 // loop_footer
      %s18 = sadd.s32 1, %s14
    $region7: #{tpu_custom_call.1} parent=1 // loop_footer_branch
      %13 = sbr.rel target = $region3
    $region8: #{tpu_custom_call.1} parent=1 // loop_exit
      _
    %346 = vsyncpa [#allocation3], 1
    %s347 = scalar_lea.sflag [#allocation3], 1
    %348 = vsyncpa %s347, 1

</llo_original>
